<compile_context>
chip_gen: v5e
topology: v5e:2x2
jax: 0.10.0
libtpu: 0.0.40
codegen_flags: <defaults>
</compile_context>

<pallas_src>
from functools import partial

import jax
import jax.numpy as jnp
from jax.experimental import pallas as pl
from jax.experimental.pallas import tpu as pltpu


def _ls_ce_kernel(x_ref, t_ref, out_ref, *,
                  w_logd, w_cross, w_smooth, n_rows, tile_n, has_remainder):
    i = pl.program_id(0)

    x = x_ref[...].astype(jnp.float32)          # (TILE_N, C)
    t = t_ref[...]                              # (TILE_N, 1) int32

    # Numerically-stable log-softmax pieces (no full log_y_hat tensor):
    #   log_y_hat = (x - m) - log(sum(exp(x - m)))
    m = jnp.max(x, axis=1, keepdims=True)                      # (TILE_N, 1)
    shifted = x - m                                            # (TILE_N, C)
    denom = jnp.sum(jnp.exp(shifted), axis=1, keepdims=True)   # (TILE_N, 1)
    log_denom = jnp.log(denom)                                 # (TILE_N, 1)

    # One-hot gather of shifted[n, target[n]] via select + row reduce.
    class_ids = jax.lax.broadcasted_iota(jnp.int32, x.shape, dimension=1)
    onehot = class_ids == t                                    # (TILE_N, C)
    shifted_at_t = jnp.sum(jnp.where(onehot, shifted, 0.0),
                           axis=1, keepdims=True)              # (TILE_N, 1)
    row_sum = jnp.sum(shifted, axis=1, keepdims=True)          # (TILE_N, 1)

    # Per-row contribution with confidence, smoothing/C and 1/N folded in:
    #   loss/N = (1/N)*log_denom - (conf/N)*shifted_at_t - (smooth/(N*C))*row_sum
    loss = w_logd * log_denom - w_cross * shifted_at_t - w_smooth * row_sum

    if not has_remainder:
        out_ref[...] = jnp.sum(loss, axis=0, keepdims=True).reshape(1, 1, 1)
    else:
        last = pl.num_programs(0) - 1

        @pl.when(i != last)
        def _():
            out_ref[...] = jnp.sum(loss, axis=0, keepdims=True).reshape(1, 1, 1)

        @pl.when(i == last)
        def _():
            # Mask rows past the true batch size (partial last tile).  Keep
            # this a select (not a multiply) so uninitialized padded rows
            # cannot propagate NaN/Inf.
            row_ids = jax.lax.broadcasted_iota(jnp.int32, loss.shape, 0)
            valid = (row_ids + i * tile_n) < n_rows
            masked = jnp.where(valid, loss, 0.0)
            out_ref[...] = jnp.sum(masked, axis=0, keepdims=True).reshape(1, 1, 1)


def _vmem_limit_bytes():
    """~75% of physical VMEM, capped at 96 MiB; safe 48 MiB fallback."""
    cap = 64 * 1024 * 1024                      # v7x-safe fallback
    try:
        info = pltpu.get_tpu_info()
        cap = int(getattr(info, "vmem_capacity_bytes", cap))
    except Exception:
        pass
    limit = (cap * 3) // 4
    return max(32 * 1024 * 1024, min(limit, 96 * 1024 * 1024))


def _pick_tile_n(n, c, itemsize, vmem_limit):
    # Budget against the f32 working set, not just the input bytes:
    #   2x double-buffered input tile           : 2 * C * itemsize  per row
    #   ~4 live f32 (tile_n, C) intermediates   : 4 * C * 4         per row
    #   double-buffered (tile_n, 1)->128-lane-padded i32 target block:
    #                                             2 * 128 * 4       per row
    budget = vmem_limit - 4 * 1024 * 1024       # headroom for compiler scratch
    per_row = 2 * c * itemsize + 4 * c * 4 + 2 * 128 * 4
    tile = budget // max(1, per_row)
    tile = (tile // 8) * 8                      # sublane-aligned
    tile = max(tile, 8)
    if tile >= n:
        return n                                # whole batch in one tile
    return int(tile)


def label_smoothing_cross_entropy(x, target, smoothing=0.1, tile_n=None):
    """x: (N, C) float (f32 or bf16), target: (N,) int. Returns scalar f32."""
    assert 0.0 < smoothing < 1.0
    confidence = 1.0 - smoothing
    n, c = x.shape
    t2 = target.reshape(n, 1).astype(jnp.int32)

    itemsize = jnp.dtype(x.dtype).itemsize
    vmem_limit = _vmem_limit_bytes()
    if tile_n is None:
        tile_n = _pick_tile_n(n, c, itemsize, vmem_limit)
    tile_n = int(tile_n)

    num_tiles = pl.cdiv(n, tile_n)
    has_remainder = (n % tile_n) != 0

    kernel = partial(
        _ls_ce_kernel,
        w_logd=1.0 / n,
        w_cross=confidence / n,
        w_smooth=smoothing / (n * c),
        n_rows=int(n),
        tile_n=tile_n,
        has_remainder=has_remainder,
    )

    cost = pl.CostEstimate(
        flops=8 * n * c,
        transcendentals=n * c,                  # exp per element (+ cheap logs)
        bytes_accessed=n * c * itemsize + n * 4 + num_tiles * 4,
    )

    partials = pl.pallas_call(
        kernel,
        out_shape=jax.ShapeDtypeStruct((num_tiles, 1, 1), jnp.float32),
        grid=(num_tiles,),
        in_specs=[
            pl.BlockSpec((tile_n, c), lambda i: (i, 0)),
            pl.BlockSpec((tile_n, 1), lambda i: (i, 0)),
        ],
        out_specs=pl.BlockSpec((1, 1, 1), lambda i: (i, 0, 0)),
        compiler_params=pltpu.CompilerParams(
            dimension_semantics=("parallel",),   # independent per-tile partials
            vmem_limit_bytes=vmem_limit,
        ),
        cost_estimate=cost,
    )(x, t2)

    # 1/N already folded into per-row weights: total loss is just the sum of
    # the per-tile partials.
    return jnp.sum(partials)


def _reference(x, target, smoothing):
    x = x.astype(jnp.float32)
    n = x.shape[0]
    y_hat = jax.nn.softmax(x, axis=1)
    cross = -jnp.log(y_hat[jnp.arange(n), target])
    smooth = -jnp.log(y_hat).mean(axis=1)
    return ((1.0 - smoothing) * cross + smoothing * smooth).mean()


if __name__ == "__main__":
    key = jax.random.PRNGKey(0)
    k1, k2, k3, k4, k5, k6 = jax.random.split(key, 6)

    # Test 1: small batch, single tile (auto tile size = full batch).
    N, C = 8, 32
    x = jax.random.normal(k1, (N, C), dtype=jnp.float32)
    target = jax.random.randint(k2, (N,), 0, C, dtype=jnp.int32)
    loss = jax.block_until_ready(label_smoothing_cross_entropy(x, target, 0.1))
    ref = _reference(x, target, 0.1)
    assert jnp.allclose(loss, ref, rtol=1e-5, atol=1e-5), (loss, ref)

    # Test 2: multi-step parallel grid with a masked partial last tile.
    N2, C2 = 20, 128
    x2 = jax.random.normal(k3, (N2, C2), dtype=jnp.float32)
    target2 = jax.random.randint(k4, (N2,), 0, C2, dtype=jnp.int32)
    loss2 = jax.block_until_ready(
        label_smoothing_cross_entropy(x2, target2, 0.1, tile_n=8))
    ref2 = _reference(x2, target2, 0.1)
    assert jnp.allclose(loss2, ref2, rtol=1e-5, atol=1e-5), (loss2, ref2)

    # Test 3: bf16 logits, exact tiling (mask statically omitted).
    N3, C3 = 64, 256
    x3 = jax.random.normal(k5, (N3, C3), dtype=jnp.bfloat16)
    target3 = jax.random.randint(k6, (N3,), 0, C3, dtype=jnp.int32)
    loss3 = jax.block_until_ready(
        label_smoothing_cross_entropy(x3, target3, 0.1, tile_n=16))
    ref3 = _reference(x3, target3, 0.1)
    assert jnp.allclose(loss3, ref3, rtol=1e-3, atol=1e-3), (loss3, ref3)

    print("KERNEL_OK")
</pallas_src>

<mosaic_0001>
module attributes {stable_mosaic.version = 11 : i64} {
  func.func @_ls_ce_kernel(%arg0: i32, %arg1: memref<8x32xf32, #tpu.memory_space<vmem>>, %arg2: memref<8x1xi32, #tpu.memory_space<vmem>>, %arg3: memref<1x1x1xf32, #tpu.memory_space<vmem>>) attributes {dimension_semantics = [#tpu.dimension_semantics<parallel>], iteration_bounds = array<i64: 1>, scalar_prefetch = 0 : i64, scratch_operands = 0 : i64, tpu.core_type = #tpu.core_type<tc>, window_params = [{transform_indices = @transform_0, window_bounds = array<i64: 8, 32>}, {transform_indices = @transform_1, window_bounds = array<i64: 8, 1>}, {transform_indices = @transform_2, window_bounds = array<i64: 1, 1, 1>}]} {
    %c0 = arith.constant 0 : index
    %c0_0 = arith.constant 0 : index
    %0 = vector.load %arg1[%c0, %c0_0] : memref<8x32xf32, #tpu.memory_space<vmem>>, vector<8x32xf32>
    %c0_1 = arith.constant 0 : index
    %c0_2 = arith.constant 0 : index
    %1 = vector.load %arg2[%c0_1, %c0_2] : memref<8x1xi32, #tpu.memory_space<vmem>>, vector<8x1xi32>
    %cst = arith.constant dense<0xFF800000> : vector<8xf32>
    %2 = vector.multi_reduction <maximumf>, %0, %cst [1] : vector<8x32xf32> to vector<8xf32>
    %3 = vector.shape_cast %2 : vector<8xf32> to vector<8x1xf32>
    %4 = vector.broadcast %3 : vector<8x1xf32> to vector<8x32xf32>
    %5 = arith.subf %0, %4 : vector<8x32xf32>
    %6 = math.exp %5 : vector<8x32xf32>
    %cst_3 = arith.constant dense<0.000000e+00> : vector<8xf32>
    %7 = vector.multi_reduction <add>, %6, %cst_3 [1] : vector<8x32xf32> to vector<8xf32>
    %8 = vector.shape_cast %7 : vector<8xf32> to vector<8x1xf32>
    %9 = math.log %8 : vector<8x1xf32>
    %10 = tpu.iota {dimensions = array<i32: 1>} : vector<8x32xi32>
    %11 = vector.broadcast %1 : vector<8x1xi32> to vector<8x32xi32>
    %12 = arith.cmpi eq, %10, %11 : vector<8x32xi32>
    %cst_4 = arith.constant 0.000000e+00 : f32
    %13 = vector.broadcast %cst_4 : f32 to vector<8x32xf32>
    %14 = arith.select %12, %5, %13 : vector<8x32xi1>, vector<8x32xf32>
    %cst_5 = arith.constant dense<0.000000e+00> : vector<8xf32>
    %15 = vector.multi_reduction <add>, %14, %cst_5 [1] : vector<8x32xf32> to vector<8xf32>
    %16 = vector.shape_cast %15 : vector<8xf32> to vector<8x1xf32>
    %cst_6 = arith.constant dense<0.000000e+00> : vector<8xf32>
    %17 = vector.multi_reduction <add>, %5, %cst_6 [1] : vector<8x32xf32> to vector<8xf32>
    %18 = vector.shape_cast %17 : vector<8xf32> to vector<8x1xf32>
    %cst_7 = arith.constant 1.250000e-01 : f32
    %19 = vector.broadcast %cst_7 : f32 to vector<8x1xf32>
    %20 = arith.mulf %19, %9 : vector<8x1xf32>
    %cst_8 = arith.constant 1.125000e-01 : f32
    %21 = vector.broadcast %cst_8 : f32 to vector<8x1xf32>
    %22 = arith.mulf %21, %16 : vector<8x1xf32>
    %23 = arith.subf %20, %22 : vector<8x1xf32>
    %cst_9 = arith.constant 3.906250e-04 : f32
    %24 = vector.broadcast %cst_9 : f32 to vector<8x1xf32>
    %25 = arith.mulf %24, %18 : vector<8x1xf32>
    %26 = arith.subf %23, %25 : vector<8x1xf32>
    %cst_10 = arith.constant dense<0.000000e+00> : vector<1xf32>
    %27 = vector.multi_reduction <add>, %26, %cst_10 [0] : vector<8x1xf32> to vector<1xf32>
    %28 = vector.shape_cast %27 : vector<1xf32> to vector<1x1xf32>
    %29 = vector.shape_cast %28 : vector<1x1xf32> to vector<1x1x1xf32>
    %c0_11 = arith.constant 0 : index
    %c0_12 = arith.constant 0 : index
    %c0_13 = arith.constant 0 : index
    %30 = vector.load %arg3[%c0_11, %c0_12, %c0_13] : memref<1x1x1xf32, #tpu.memory_space<vmem>>, vector<1x1x1xf32>
    tpu.vector_store %arg3[%c0_11, %c0_12, %c0_13], %29 {strides = array<i32>} : memref<1x1x1xf32, #tpu.memory_space<vmem>>, vector<1x1x1xf32>,
    return
  }
  func.func @transform_0(%arg0: i32) -> (i32, i32) {
    %c0_i32 = arith.constant 0 : i32
    %c0_i32_0 = arith.constant 0 : i32
    return %arg0, %c0_i32 : i32, i32
  }
  func.func @transform_1(%arg0: i32) -> (i32, i32) {
    %c0_i32 = arith.constant 0 : i32
    %c0_i32_0 = arith.constant 0 : i32
    return %arg0, %c0_i32 : i32, i32
  }
  func.func @transform_2(%arg0: i32) -> (i32, i32, i32) {
    %c0_i32 = arith.constant 0 : i32
    %c0_i32_0 = arith.constant 0 : i32
    %c0_i32_1 = arith.constant 0 : i32
    return %arg0, %c0_i32, %c0_i32_0 : i32, i32, i32
  }
}

</mosaic_0001>

<llo_original>
// kernel: tpu_custom_call.1
$region0: #{tpu_custom_call.1}
  #allocation0 [shape = 'u32[]', space=smem, size = 0x4, offset = 0x4, fixed_abs, tag = 'smem constant byte address 0x4 - core index']
  #allocation1 [shape = 'u32[72,128]{1,0:T(1,128)}', space=vmem, size = 0x9000, scoped, tag = 'internal scratch']
  %s0 = inlined_call_operand.vmem [shape: f32[8,32], index: 0, kind: input, shape index: {}]
  %s1 = inlined_call_operand.vmem [shape: s32[8,1], index: 1, kind: input, shape index: {}]
  %s2 = inlined_call_operand.hbm [shape: f32[1,1,1], index: 2, kind: output, shape index: {}]
  %s3 = sld [smem:[#allocation0]]
  $region18: #{tpu_custom_call.1} parent=0
    _
  %s5 = ssub.s32 1, %s3
  %s6 = scalar_select 0, %s5, %s3
  $region1: #{tpu_custom_call.1} parent=0
    #allocation2 [shape = 'u8[512]{0}', space=vmem, size = 0x400, scoped, tag = 'output window, operand 0, single buffered']
    #allocation3 [shape = 's32[1]{0}', space=sflag, size = 0x4, scoped, tag = 'scoped memory for tpu_custom_call.1']
    %7 = vsyncpa [#allocation3], 0
    // Predicated region
    $region2: #{tpu_custom_call.1} parent=1 // pred_check
      _
    $region3: #{tpu_custom_call.1} parent=1 // pred_check_branch
      %9 = sbr.rel (0) target = $region5
    $region4: #{tpu_custom_call.1} parent=1 // pred_region
      _
    $region5: #{tpu_custom_call.1} parent=1 // pred_fallthru
      _
    // Predicated region
    $region6: #{tpu_custom_call.1} parent=1 // pred_check
      _
    $region7: #{tpu_custom_call.1} parent=1 // pred_check_branch
      %11 = sbr.rel (0) target = $region9
    $region8: #{tpu_custom_call.1} parent=1 // pred_region
      _
    $region9: #{tpu_custom_call.1} parent=1 // pred_fallthru
      _
    %v12 = vld [vmem:[%s0] sm:$0xff]
    %v13 = vld [vmem:[%s1] sm:$0xff]
    %vm14 = vcmask 261120
    %v15 = vsel %vm14, %v12, -inf
    %16 = vmax.xlane.f32.xlu0 %v15
    %v17 = vpop.xlane.xlu0 %16
    %v18 = vsub.f32 %v12, %v17
    %v19 = vmul.f32 %v18, 1.442695
    %v20 = vpow.pop %v19
    %v21 = vsel %vm14, %v20, 0.0
    %22 = vadd.xlane.f32.xlu0 %v21
    %v23 = vpop.xlane.xlu0 %22
    %v24 = vlog2.pop %v23
    %v25 = vmul.f32 %v24, 0.6931472
    %v26 = vlaneseq
    %v27 = vand.u32 %v26, 127
    %28 = vset.pattern.permute.xlu0 0
    %29 = vperm.xlu0 %28, %v13
    %v30 = vpop.permute.xlu0 %29
    %vm31 = vcmp.eq.s32.totalorder %v27, %v30
    %v32 = vsel %vm31, %v18, 0.0
    %v33 = vsel %vm14, %v32, 0.0
    %34 = vadd.xlane.f32.xlu0 %v33
    %v35 = vpop.xlane.xlu0 %34
    %v36 = vsel %vm14, %v18, 0.0
    %37 = vadd.xlane.f32.xlu0 %v36
    %v38 = vpop.xlane.xlu0 %37
    %v39 = vmul.f32 %v25, 0.125
    %v40 = vmul.f32 %v35, 0.1125
    %v41 = vsub.f32 %v39, %v40
    %v42 = vmul.f32 %v38, 0.000390625
    %v43 = vsub.f32 %v41, %v42
    %v44 = vrot.slane %v43, 4
    %v45 = vadd.f32 %v43, %v44
    %v46 = vrot.slane %v45, 2
    %v47 = vadd.f32 %v45, %v46
    %v48 = vrot.slane %v47, 1
    %v49 = vadd.f32 %v47, %v48
    %vm50 = vcmask 0
    %51 = vst.msk [vmem:[#allocation2] sm:$0x1] %vm50, %v49
    // Predicated region
    $region10: #{tpu_custom_call.1} parent=1 // pred_check
      _
    $region11: #{tpu_custom_call.1} parent=1 // pred_check_branch
      %53 = sbr.rel (0) target = $region13
    $region12: #{tpu_custom_call.1} parent=1 // pred_region
      %55 = vsyncadd [#allocation3], 0
      %s57 = sshll.u32 [#allocation2], 4
      %s58 = int_to_ptr.vmem [resolvable:$true] %s57
      %s59 = sshll.u32 %s2, 4
      %s60 = int_to_ptr.hbm [resolvable:$true] %s59
      %62 = dma.vmem_to_hbm [thread:$0]  %s58, 16, %s60, [#allocation3]
    $region13: #{tpu_custom_call.1} parent=1 // pred_fallthru
      _
    // Predicated region
    $region14: #{tpu_custom_call.1} parent=1 // pred_check
      _
    $region15: #{tpu_custom_call.1} parent=1 // pred_check_branch
      %64 = sbr.rel (0) target = $region17
    $region16: #{tpu_custom_call.1} parent=1 // pred_region
      %66 = dma.done [#allocation3], 16
    $region17: #{tpu_custom_call.1} parent=1 // pred_fallthru
      _
    %67 = vsyncpa [#allocation3], 1

</llo_original>
